<compile_context>
chip_gen: v7x
topology: tpu7x:2x2x1
jax: 0.10.0
libtpu: 0.0.40
codegen_flags: <defaults>
</compile_context>

<pallas_src>
import math
from functools import partial

import jax
import jax.numpy as jnp
from jax import lax
from jax.experimental import pallas as pl
from jax.experimental.pallas import tpu as pltpu


# ---------------------------------------------------------------------------
# Pass 1: per-(batch, kv-chunk) max of the projected key features.
# Fully parallel; the global max is reduced with jnp.max outside the kernel.
# ---------------------------------------------------------------------------
def _kmax_kernel(x_ref, wkf_ref, o_ref):
    x = x_ref[0]                                                 # (TK, DIM) bf16
    kd = jnp.dot(x, wkf_ref[...], preferred_element_type=jnp.float32)
    o_ref[0, 0] = jnp.full((1, 1), jnp.max(kd), dtype=jnp.float32)


# ---------------------------------------------------------------------------
# Pass 2a: per-batch KV context accumulation (computed once, not per q-chunk).
# Accumulates a dense (H*m, H*d+1) [ctx | k_cumsum] in VMEM; masks it to
# block-diagonal and writes (H*m, H*d+H) at the last kv step.
# ---------------------------------------------------------------------------
def _context_kernel(kmax_ref, x_ref, wkv_ref, wkf_ref, sumd_ref, expm_ref,
                    ctx_ref, acc_ref, *, heads, dim_head, nb_features, eps):
    H, d, m = heads, dim_head, nb_features
    ratio = float(m) ** -0.5
    ki = pl.program_id(1)
    nk = pl.num_programs(1)

    @pl.when(ki == 0)
    def _init():
        acc_ref[...] = jnp.zeros_like(acc_ref)

    xkv = x_ref[0]                                               # (TK, DIM) bf16
    kv = jnp.dot(xkv, wkv_ref[...], preferred_element_type=jnp.float32)
    k2 = kv[:, :H * d]                                           # (TK, H*d)
    v2 = kv[:, H * d:]                                           # (TK, H*d)

    # Feature map: dense pre-composed projection (no block-diag zeros on MXU).
    k_dash = jnp.dot(xkv, wkf_ref[...],
                     preferred_element_type=jnp.float32)         # (TK, H*m)
    # diag = 0.5*c^2 * per-head row-sum of k2^2 (tiny matmuls, no dblk).
    diag_h = jnp.dot(k2 * k2, sumd_ref[...],
                     preferred_element_type=jnp.float32)         # (TK, H)
    k_diag = jnp.dot(diag_h, expm_ref[...],
                     preferred_element_type=jnp.float32)         # (TK, H*m)

    k_prime = ratio * (jnp.exp(k_dash - k_diag - kmax_ref[0]) + eps)

    ones_col = jnp.ones((xkv.shape[0], 1), jnp.float32)
    v_aug = jnp.concatenate([v2, ones_col], axis=-1)             # (TK, H*d+1)
    acc_ref[...] += lax.dot_general(
        k_prime.astype(jnp.bfloat16), v_aug.astype(jnp.bfloat16),
        (((0,), (0,)), ((), ())),
        preferred_element_type=jnp.float32)                      # (H*m, H*d+1)

    @pl.when(ki == nk - 1)
    def _finalize():
        acc = acc_ref[...]
        row_h = lax.broadcasted_iota(jnp.int32, (H * m, H * d), 0) // m
        col_h = lax.broadcasted_iota(jnp.int32, (H * m, H * d), 1) // d
        ctx_bd = jnp.where(row_h == col_h, acc[:, :H * d], 0.0)
        row_h2 = lax.broadcasted_iota(jnp.int32, (H * m, H), 0) // m
        col_h2 = lax.broadcasted_iota(jnp.int32, (H * m, H), 1)
        kcum_bd = jnp.where(
            row_h2 == col_h2,
            jnp.broadcast_to(acc[:, H * d:H * d + 1], (H * m, H)), 0.0)
        ctx_ref[0] = jnp.concatenate([ctx_bd, kcum_bd], axis=-1)  # (H*m, H*d+H)


# ---------------------------------------------------------------------------
# Pass 2b: fully-parallel q-side consumer.
# ---------------------------------------------------------------------------
def _query_kernel(x_ref, ctx_ref, wq_ref, wqf_ref, sumd_ref, expm_ref,
                  bcd_ref, wo_ref, bo_ref, o_ref,
                  *, heads, dim_head, nb_features, eps):
    H, d, m = heads, dim_head, nb_features
    ratio = float(m) ** -0.5

    xq = x_ref[0]                                                # (TQ, DIM) bf16
    q2 = jnp.dot(xq, wq_ref[...], preferred_element_type=jnp.float32)
    q_dash = jnp.dot(xq, wqf_ref[...],
                     preferred_element_type=jnp.float32)         # (TQ, H*m)
    diag_h = jnp.dot(q2 * q2, sumd_ref[...],
                     preferred_element_type=jnp.float32)         # (TQ, H)
    q_diag = jnp.dot(diag_h, expm_ref[...],
                     preferred_element_type=jnp.float32)         # (TQ, H*m)

    # Per-head per-row max stabilizer (reference: amax over the feature dim).
    rmax_parts = [jnp.max(q_dash[:, h * m:(h + 1) * m], axis=-1, keepdims=True)
                  for h in range(H)]
    rmax_small = jnp.concatenate(rmax_parts, axis=-1)            # (TQ, H)
    rmax_full = jnp.dot(rmax_small, expm_ref[...],
                        preferred_element_type=jnp.float32)      # (TQ, H*m)

    q_prime = ratio * (jnp.exp(q_dash - q_diag - rmax_full) + eps)

    # One lane-dense matmul against the block-diagonal context (+ k_cumsum).
    big = jnp.dot(q_prime.astype(jnp.bfloat16),
                  ctx_ref[0].astype(jnp.bfloat16),
                  preferred_element_type=jnp.float32)            # (TQ, H*d+H)
    nums = big[:, :H * d]                                        # (TQ, H*d)
    dens = big[:, H * d:]                                        # (TQ, H)
    inv = pl.reciprocal(dens, approx=True)
    inv_full = jnp.dot(inv, bcd_ref[...],
                       preferred_element_type=jnp.float32)       # (TQ, H*d)
    out_all = nums * inv_full                                    # (TQ, H*d)

    y = jnp.dot(out_all.astype(jnp.bfloat16), wo_ref[...],
                preferred_element_type=jnp.float32) + bo_ref[...]
    o_ref[0] = y                                                 # (TQ, DIM)


def _pick_chunk(n):
    """Largest MXU/lane-friendly chunk that divides n (fall back to n)."""
    for cand in (1024, 512, 256, 128):
        if n % cand == 0:
            return cand
    return n


def double_attention(x, params, *, heads, dim_head, eps=1e-4):
    B, N, DIM = x.shape
    H, d = heads, dim_head
    m = params['proj_t'].shape[1]
    c = float(d) ** -0.25
    f32, bf16 = jnp.float32, jnp.bfloat16

    tq = _pick_chunk(N)
    tk = _pick_chunk(N)
    qc, kc = N // tq, N // tk

    # Pre-composed / constant matrices (built once, outside the kernels).
    eye_h = jnp.eye(H, dtype=f32)
    blk_proj = jnp.kron(eye_h, params['proj_t'].astype(f32))       # (H*d, H*m)
    w_qfeat = ((params['wq'] * c) @ blk_proj).astype(bf16)         # (DIM, H*m)
    w_kfeat = ((params['wk'] * c) @ blk_proj).astype(bf16)         # (DIM, H*m)
    w_kv = jnp.concatenate([params['wk'], params['wv']], axis=1).astype(bf16)
    wq_b = params['wq'].astype(bf16)
    wo_b = params['wo'].astype(bf16)
    bo = params['bo'].astype(f32)
    sumblk_d = jnp.kron(eye_h, jnp.ones((d, 1), f32)) * (0.5 * c * c)  # (H*d, H)
    expand_m = jnp.kron(eye_h, jnp.ones((1, m), f32))               # (H, H*m)
    bcast_d = jnp.kron(eye_h, jnp.ones((1, d), f32))                # (H, H*d)
    x_b = x.astype(bf16)

    # VMEM budget: ~3/4 of the chip's capacity, capped at 96 MiB
    # (~48 MiB on v7x, 96 MiB on v5e/v6e).
    try:
        vmem_cap = int(pltpu.get_tpu_info().vmem_capacity_bytes)
    except Exception:
        vmem_cap = 128 * 1024 * 1024
    vmem_limit = int(min(vmem_cap * 3 // 4, 96 * 1024 * 1024))

    # ---- pass 1: per-block key-feature max, reduced outside ----------------
    blk_max = pl.pallas_call(
        _kmax_kernel,
        out_shape=jax.ShapeDtypeStruct((B, kc, 1, 1), f32),
        grid=(B, kc),
        in_specs=[
            pl.BlockSpec((1, tk, DIM), lambda b, k: (b, k, 0)),       # x
            pl.BlockSpec((DIM, H * m), lambda b, k: (0, 0)),          # w_kfeat
        ],
        out_specs=pl.BlockSpec((1, 1, 1, 1), lambda b, k: (b, k, 0, 0)),
        compiler_params=pltpu.CompilerParams(
            dimension_semantics=("parallel", "parallel"),
            vmem_limit_bytes=vmem_limit),
    )(x_b, w_kfeat)
    k_max = jnp.max(blk_max).reshape(1)                              # (1,) f32

    # ---- pass 2a: per-batch context accumulation (once per batch) ----------
    ctx = pl.pallas_call(
        partial(_context_kernel, heads=H, dim_head=d, nb_features=m, eps=eps),
        out_shape=jax.ShapeDtypeStruct((B, H * m, H * d + H), f32),
        grid=(B, kc),
        in_specs=[
            pl.BlockSpec(memory_space=pltpu.MemorySpace.SMEM),        # k_max
            pl.BlockSpec((1, tk, DIM), lambda b, k: (b, k, 0)),       # x (kv)
            pl.BlockSpec((DIM, 2 * H * d), lambda b, k: (0, 0)),      # w_kv
            pl.BlockSpec((DIM, H * m), lambda b, k: (0, 0)),          # w_kfeat
            pl.BlockSpec((H * d, H), lambda b, k: (0, 0)),            # sumblk_d
            pl.BlockSpec((H, H * m), lambda b, k: (0, 0)),            # expand_m
        ],
        out_specs=pl.BlockSpec((1, H * m, H * d + H), lambda b, k: (b, 0, 0)),
        scratch_shapes=[pltpu.VMEM((H * m, H * d + 1), f32)],
        compiler_params=pltpu.CompilerParams(
            dimension_semantics=("parallel", "arbitrary"),
            vmem_limit_bytes=vmem_limit),
    )(k_max, x_b, w_kv, w_kfeat, sumblk_d, expand_m)

    # ---- pass 2b: fully-parallel q-side consumer ----------------------------
    out = pl.pallas_call(
        partial(_query_kernel, heads=H, dim_head=d, nb_features=m, eps=eps),
        out_shape=jax.ShapeDtypeStruct((B, N, DIM), f32),
        grid=(B, qc),
        in_specs=[
            pl.BlockSpec((1, tq, DIM), lambda b, q: (b, q, 0)),       # x (q)
            pl.BlockSpec((1, H * m, H * d + H), lambda b, q: (b, 0, 0)),  # ctx
            pl.BlockSpec((DIM, H * d), lambda b, q: (0, 0)),          # wq
            pl.BlockSpec((DIM, H * m), lambda b, q: (0, 0)),          # w_qfeat
            pl.BlockSpec((H * d, H), lambda b, q: (0, 0)),            # sumblk_d
            pl.BlockSpec((H, H * m), lambda b, q: (0, 0)),            # expand_m
            pl.BlockSpec((H, H * d), lambda b, q: (0, 0)),            # bcast_d
            pl.BlockSpec((H * d, DIM), lambda b, q: (0, 0)),          # wo
            pl.BlockSpec((1, DIM), lambda b, q: (0, 0)),              # bo
        ],
        out_specs=pl.BlockSpec((1, tq, DIM), lambda b, q: (b, q, 0)),
        compiler_params=pltpu.CompilerParams(
            dimension_semantics=("parallel", "parallel"),
            vmem_limit_bytes=vmem_limit),
    )(x_b, ctx, wq_b, w_qfeat, sumblk_d, expand_m, bcast_d, wo_b, bo)
    return out


# ----- plain-JAX reference (for validation only) ------------------------------
def reference(x, params, heads, dim_head, eps=1e-4):
    B, N, DIM = x.shape
    d, m = dim_head, params['proj_t'].shape[1]
    q = x @ params['wq']
    k = x @ params['wk']
    v = x @ params['wv']
    split = lambda t: t.reshape(B, N, heads, d).transpose(0, 2, 1, 3)
    q, k, v = split(q), split(k), split(v)
    c, ratio = d ** -0.25, m ** -0.5
    proj = params['proj_t'].T                                       # (m, d)
    q_dash = jnp.einsum('bhnd,md->bhnm', q * c, proj)
    k_dash = jnp.einsum('bhnd,md->bhnm', k * c, proj)
    diag_q = (jnp.sum(q * q, -1, keepdims=True) / 2.0) * c ** 2
    diag_k = (jnp.sum(k * k, -1, keepdims=True) / 2.0) * c ** 2
    q_p = ratio * (jnp.exp(q_dash - diag_q
                           - jnp.max(q_dash, -1, keepdims=True)) + eps)
    k_p = ratio * (jnp.exp(k_dash - diag_k - jnp.max(k_dash)) + eps)
    k_cumsum = k_p.sum(-2)
    d_inv = 1.0 / jnp.einsum('bhnm,bhm->bhn', q_p, k_cumsum)
    ctx = jnp.einsum('bhnm,bhnd->bhmd', k_p, v)
    out = jnp.einsum('bhmd,bhnm,bhn->bhnd', ctx, q_p, d_inv)
    out = out.transpose(0, 2, 1, 3).reshape(B, N, heads * d)
    return out @ params['wo'] + params['bo']


def gaussian_orthogonal_matrix(key, nb_rows, nb_cols):
    # scaling=0 variant from Performer: orthogonal blocks * row-norm multipliers
    n_full = nb_rows // nb_cols
    keys = jax.random.split(key, n_full + 2)
    blocks = []
    for i in range(n_full):
        g = jax.random.normal(keys[i], (nb_cols, nb_cols), jnp.float32)
        qm, _ = jnp.linalg.qr(g)
        blocks.append(qm.T)
    rem = nb_rows - n_full * nb_cols
    if rem > 0:
        g = jax.random.normal(keys[n_full], (nb_cols, nb_cols), jnp.float32)
        qm, _ = jnp.linalg.qr(g)
        blocks.append(qm.T[:rem])
    mat = jnp.concatenate(blocks, axis=0)                            # (m, d)
    mult = jnp.linalg.norm(
        jax.random.normal(keys[n_full + 1], (nb_rows, nb_cols), jnp.float32),
        axis=1)
    return mult[:, None] * mat


if __name__ == "__main__":
    # TODO(synk): local-attention heads, cross-attention (context list), rotary
    # pos_emb and dropout>0 paths of the module are not exercised (defaults).
    B, N, DIM, HEADS, DIM_HEAD = 2, 16, 32, 4, 8
    INNER = HEADS * DIM_HEAD
    NB_FEATURES = int(DIM_HEAD * math.log(DIM_HEAD))                 # = 16

    key = jax.random.PRNGKey(0)
    ks = jax.random.split(key, 8)
    scale = 0.05
    params = {
        'wq': jax.random.normal(ks[0], (DIM, INNER), jnp.float32) * scale,
        'wk': jax.random.normal(ks[1], (DIM, INNER), jnp.float32) * scale,
        'wv': jax.random.normal(ks[2], (DIM, INNER), jnp.float32) * scale,
        'wo': jax.random.normal(ks[3], (INNER, DIM), jnp.float32) * scale,
        'bo': jax.random.normal(ks[4], (1, DIM), jnp.float32) * scale,
        'proj_t': gaussian_orthogonal_matrix(ks[5], NB_FEATURES,
                                             DIM_HEAD).T.astype(jnp.float32),
    }
    x = jax.random.normal(ks[6], (B, N, DIM), jnp.float32)

    out = double_attention(x, params, heads=HEADS, dim_head=DIM_HEAD)
    out = jax.block_until_ready(out)

    ref = reference(x, params, HEADS, DIM_HEAD)
    assert out.shape == (B, N, DIM)
    assert jnp.allclose(out, ref, atol=1e-2, rtol=1e-2), (
        f"max abs diff {jnp.max(jnp.abs(out - ref))}")
    print("KERNEL_OK")
</pallas_src>

<mosaic_0001>
module attributes {stable_mosaic.version = 11 : i64} {
  func.func @_kmax_kernel(%arg0: i32, %arg1: i32, %arg2: memref<1x16x32xbf16, #tpu.memory_space<vmem>>, %arg3: memref<32x64xbf16, #tpu.memory_space<vmem>>, %arg4: memref<1x1x1x1xf32, #tpu.memory_space<vmem>>) attributes {dimension_semantics = [#tpu.dimension_semantics<parallel>, #tpu.dimension_semantics<parallel>], iteration_bounds = array<i64: 2, 1>, scalar_prefetch = 0 : i64, scratch_operands = 0 : i64, tpu.core_type = #tpu.core_type<tc>, window_params = [{transform_indices = @transform_0, window_bounds = array<i64: 1, 16, 32>}, {pipeline_mode = #tpu.pipeline_mode<synchronous>, transform_indices = @transform_1, window_bounds = array<i64: 32, 64>}, {transform_indices = @transform_2, window_bounds = array<i64: 1, 1, 1, 1>}]} {
    %c0 = arith.constant 0 : index
    %c0_0 = arith.constant 0 : index
    %c0_1 = arith.constant 0 : index
    %0 = vector.load %arg2[%c0, %c0_0, %c0_1] : memref<1x16x32xbf16, #tpu.memory_space<vmem>>, vector<1x16x32xbf16>
    %1 = vector.shape_cast %0 : vector<1x16x32xbf16> to vector<16x32xbf16>
    %c0_2 = arith.constant 0 : index
    %c0_3 = arith.constant 0 : index
    %2 = vector.load %arg3[%c0_2, %c0_3] : memref<32x64xbf16, #tpu.memory_space<vmem>>, vector<32x64xbf16>
    %cst = arith.constant dense<0.000000e+00> : vector<16x64xf32>
    %3 = tpu.matmul %1, %2, %cst {dimension_numbers = #tpu.dot_dimension_numbers<[1], [0], [0], [1], [0, 0, 1, 1], [], []>} : vector<16x32xbf16>, vector<32x64xbf16>, vector<16x64xf32> -> vector<16x64xf32>
    %4 = vector.shape_cast %3 : vector<16x64xf32> to vector<1x16x64xf32>
    %cst_4 = arith.constant dense<0xFF800000> : vector<1xf32>
    %5 = vector.multi_reduction <maximumf>, %4, %cst_4 [1, 2] : vector<1x16x64xf32> to vector<1xf32>
    %6 = vector.shape_cast %5 : vector<1xf32> to vector<1x1x1xf32>
    %7 = vector.extract %6[0, 0, 0] : f32 from vector<1x1x1xf32>
    %8 = vector.broadcast %7 : f32 to vector<1x1xf32>
    %c0_5 = arith.constant 0 : index
    %c0_6 = arith.constant 0 : index
    %c0_7 = arith.constant 0 : index
    %c0_8 = arith.constant 0 : index
    %9 = vector.load %arg4[%c0_5, %c0_6, %c0_7, %c0_8] : memref<1x1x1x1xf32, #tpu.memory_space<vmem>>, vector<1x1x1x1xf32>
    %10 = vector.shape_cast %9 : vector<1x1x1x1xf32> to vector<1x1xf32>
    %11 = vector.shape_cast %8 : vector<1x1xf32> to vector<1x1x1x1xf32>
    tpu.vector_store %arg4[%c0_5, %c0_6, %c0_7, %c0_8], %11 {strides = array<i32>} : memref<1x1x1x1xf32, #tpu.memory_space<vmem>>, vector<1x1x1x1xf32>,
    return
  }
  func.func @transform_0(%arg0: i32, %arg1: i32) -> (i32, i32, i32) {
    %c0_i32 = arith.constant 0 : i32
    %c0_i32_0 = arith.constant 0 : i32
    return %arg0, %arg1, %c0_i32 : i32, i32, i32
  }
  func.func @transform_1(%arg0: i32, %arg1: i32) -> (i32, i32) {
    %c0_i32 = arith.constant 0 : i32
    %c0_i32_0 = arith.constant 0 : i32
    %c0_i32_1 = arith.constant 0 : i32
    return %c0_i32, %c0_i32_0 : i32, i32
  }
  func.func @transform_2(%arg0: i32, %arg1: i32) -> (i32, i32, i32, i32) {
    %c0_i32 = arith.constant 0 : i32
    %c0_i32_0 = arith.constant 0 : i32
    %c0_i32_1 = arith.constant 0 : i32
    return %arg0, %arg1, %c0_i32, %c0_i32_0 : i32, i32, i32, i32
  }
}

</mosaic_0001>

<llo_original>
// kernel: tpu_custom_call.1
$region0: #{tpu_custom_call.1}
  #allocation0 [shape = 'u32[]', space=smem, size = 0x4, offset = 0x4, fixed_abs, tag = 'smem constant byte address 0x4 - core index']
  #allocation1 [shape = 'u32[144,128]{1,0:T(1,128)}', space=vmem, size = 0x12000, scoped, tag = 'internal scratch']
  %s0 = inlined_call_operand.hbm [shape: bf16[2,16,32], index: 0, kind: input, shape index: {}]
  %s1 = inlined_call_operand.hbm [shape: bf16[32,64], index: 1, kind: input, shape index: {}]
  %s2 = inlined_call_operand.hbm [shape: f32[2,1,1,1], index: 2, kind: output, shape index: {}]
  %s3 = sld [smem:[#allocation0]]
  $region49: #{tpu_custom_call.1} parent=0
    _
  %s5 = ssub.s32 1, %s3
  %s6 = scalar_select 0, %s5, %s3
  $region1: #{tpu_custom_call.1} parent=0
    #allocation2 [shape = 'u8[8192]{0}', space=vmem, size = 0x2000, scoped, tag = 'input window, operand 0']
    #allocation3 [shape = 's32[2]{0}', space=sflag, size = 0x8, scoped, tag = 'scoped memory for tpu_custom_call.1']
    #allocation4 [shape = 's32[2]{0}', space=sflag, size = 0x8, scoped, tag = 'scoped memory for tpu_custom_call.1']
    #allocation5 [shape = 'u8[8192]{0}', space=vmem, size = 0x2000, scoped, tag = 'input window, operand 1, single buffered']
    #allocation6 [shape = 's32[1]{0}', space=sflag, size = 0x4, scoped, tag = 'scoped memory for tpu_custom_call.1']
    #allocation7 [shape = 'u8[1024]{0}', space=vmem, size = 0x400, scoped, tag = 'output window, operand 0']
    %7 = vsyncpa [#allocation3], 0
    %s8 = scalar_lea.sflag [#allocation3], 1
    %9 = vsyncpa %s8, 0
    %10 = vsyncpa [#allocation6], 0
    %11 = vsyncpa [#allocation4], 0
    %s12 = scalar_lea.sflag [#allocation4], 1
    %13 = vsyncpa %s12, 0
    loop: start=0, step=1, limit=4
    $region2: #{tpu_custom_call.1} parent=1 // loop_pre_header
      _
    $region3: #{tpu_custom_call.1} parent=1 // loop_header
      %s15 = sphi 0, %s19
      %p16 = scmp.ge.s32.totalorder %s15, 4
      %s22 = sphi 0, %s34
      %s23 = sphi 0, %s30
      %s24 = sphi 0, %s22
      %s25 = sphi 0, %s23
      %s26 = sphi 0, %s24
      %s27 = sphi 0, %s25
      %s39 = sphi 0, %s41
      %s42 = sphi 0, %s39
      %s43 = sphi 0, %s42
      %s59 = sphi 0, %s43
      %s63 = sphi 0, %s63
      %s65 = sphi 0, %s63
      %s66 = sphi 0, %s65
      %s80 = sphi 0, %s66
      %s88 = sphi 0, %s90
      %s91 = sphi 0, %s88
      %s92 = sphi 0, %s91
      %s108 = sphi 0, %s92
    $region4: #{tpu_custom_call.1} parent=1 // loop_header_branch
      %18 = sbr.rel (%p16) target = $region8
    $region5: #{tpu_custom_call.1} parent=1 // loop_body
      %s20 = ssub.s32 %s15, 1
      %s21 = ssub.s32 %s15, 2
      %s28 = sadd.s32 1, %s23
      %p29 = scmp.ge.s32.totalorder %s28, 1
      %s30 = scalar_select %p29, 0, %s28
      %s31 = sadd.s32 1, %s22
      %s32 = scalar_select %p29, %s31, %s22
      %p33 = scmp.ge.s32.totalorder %s32, 2
      %s34 = scalar_select %p33, 0, %s32
      %s35 = ssub.s32 %s22, %s34
      %s36 = ssub.s32 %s23, %s30
      %s37 = sor.u32 %s35, %s36
      %p38 = scmp.eq.s32.totalorder %s37, 0
      %s40 = sadd.s32 %s39, 1
      %s41 = scalar_select %p38, %s39, %s40
      %p44 = pneg %p38
      %p45 = scmp.eq.s32.totalorder %s15, 1
      %p46 = por %p44, %p45
      %p47 = scmp.ne.s32.totalorder %s39, %s42
      %p48 = scmp.eq.s32.totalorder %s15, 0
      %p49 = por %p47, %p48
      %p50 = scmp.ne.s32.totalorder %s39, %s42
      %p51 = scmp.eq.s32.totalorder %s20, 1
      %p52 = por %p50, %p51
      %p53 = scmp.ne.s32.totalorder %s42, %s43
      %p54 = scmp.eq.s32.totalorder %s20, 0
      %p55 = por %p53, %p54
      %p56 = scmp.ne.s32.totalorder %s42, %s43
      %p57 = scmp.eq.s32.totalorder %s21, 1
      %p58 = por %p56, %p57
      %p60 = scmp.ne.s32.totalorder %s43, %s59
      %p61 = scmp.eq.s32.totalorder %s21, 0
      %p62 = por %p60, %p61
      %s64 = sadd.s32 %s63, 1
      %p67 = scmp.eq.s32.totalorder %s15, 1
      %p68 = scmp.ne.s32.totalorder %s63, %s65
      %p69 = scmp.eq.s32.totalorder %s15, 0
      %p70 = por %p68, %p69
      %p71 = scmp.ne.s32.totalorder %s63, %s65
      %p72 = scmp.eq.s32.totalorder %s20, 1
      %p73 = por %p71, %p72
      %p74 = scmp.ne.s32.totalorder %s65, %s66
      %p75 = scmp.eq.s32.totalorder %s20, 0
      %p76 = por %p74, %p75
      %p77 = scmp.ne.s32.totalorder %s65, %s66
      %p78 = scmp.eq.s32.totalorder %s21, 1
      %p79 = por %p77, %p78
      %p81 = scmp.ne.s32.totalorder %s66, %s80
      %p82 = scmp.eq.s32.totalorder %s21, 0
      %p83 = por %p81, %p82
      %s84 = ssub.s32 %s22, %s34
      %s85 = ssub.s32 %s23, %s30
      %s86 = sor.u32 %s84, %s85
      %p87 = scmp.eq.s32.totalorder %s86, 0
      %s89 = sadd.s32 %s88, 1
      %s90 = scalar_select %p87, %s88, %s89
      %p93 = pneg %p87
      %p94 = scmp.eq.s32.totalorder %s15, 1
      %p95 = por %p93, %p94
      %p96 = scmp.ne.s32.totalorder %s88, %s91
      %p97 = scmp.eq.s32.totalorder %s15, 0
      %p98 = por %p96, %p97
      %p99 = scmp.ne.s32.totalorder %s88, %s91
      %p100 = scmp.eq.s32.totalorder %s20, 1
      %p101 = por %p99, %p100
      %p102 = scmp.ne.s32.totalorder %s91, %s92
      %p103 = scmp.eq.s32.totalorder %s20, 0
      %p104 = por %p102, %p103
      %p105 = scmp.ne.s32.totalorder %s91, %s92
      %p106 = scmp.eq.s32.totalorder %s21, 1
      %p107 = por %p105, %p106
      %p109 = scmp.ne.s32.totalorder %s92, %s108
      %p110 = scmp.eq.s32.totalorder %s21, 0
      %p111 = por %p109, %p110
      %p112 = scmp.le.s32.totalorder 1, %s15
      %p113 = scmp.lt.s32.totalorder %s15, 3
      %p114 = pnand %p112, %p113
      %p115 = pneg %p114
      // Predicated region
      $region9: #{tpu_custom_call.1} parent=5 // pred_check
        _
      $region10: #{tpu_custom_call.1} parent=5 // pred_check_branch
        %117 = sbr.rel (%p114) target = $region12
      $region11: #{tpu_custom_call.1} parent=5 // pred_region
        %s118 = ssub.s32 %s15, 1
        // Predicated region
        $region13: #{tpu_custom_call.1} parent=11 // pred_check
          %p119 = pneg %p76
        $region14: #{tpu_custom_call.1} parent=11 // pred_check_branch
          %121 = sbr.rel (%p119) target = $region16
        $region15: #{tpu_custom_call.1} parent=11 // pred_region
          %s123 = ssub.s32 256, 256
          %124 = vsyncadd [#allocation6], %s123
          %s125 = sshll.u32 [#allocation5], 4
          %s126 = int_to_ptr.vmem [resolvable:$true] %s125
          %131 = dma.hbm_to_vmem [thread:$0]  %s1, 256, %s126, [#allocation6], 64, 64, 4
        $region16: #{tpu_custom_call.1} parent=11 // pred_fallthru
          _
      $region12: #{tpu_custom_call.1} parent=5 // pred_fallthru
        _
      %p132 = scmp.lt.s32.totalorder %s15, 2
      // Predicated region
      $region17: #{tpu_custom_call.1} parent=5 // pred_check
        %p133 = pneg %p132
      $region18: #{tpu_custom_call.1} parent=5 // pred_check_branch
        %135 = sbr.rel (%p133) target = $region20
      $region19: #{tpu_custom_call.1} parent=5 // pred_region
        // Predicated region
        $region21: #{tpu_custom_call.1} parent=19 // pred_check
          %p136 = pneg %p49
        $region22: #{tpu_custom_call.1} parent=19 // pred_check_branch
          %138 = sbr.rel (%p136) target = $region24
        $region23: #{tpu_custom_call.1} parent=19 // pred_region
          %s139 = sand.u32 %s39, 1
          %s140 = scalar_lea.sflag [#allocation3], %s139
          %s141 = sand.u32 %s39, 1
          %s142 = smul.addr %s141, 8
          %s143 = scalar_lea.vmem [#allocation2], %s142
          %s144 = smul.u32 2, %s23
          %s146 = ssub.s32 128, 128
          %147 = vsyncadd %s140, %s146
          %s148 = smul.addr %s22, 2
          %s149 = sadd.s32 %s144, %s148
          %s150 = smul.addr %s149, 64
          %s151 = scalar_lea.hbm %s0, %s150
          %s152 = sshll.u32 %s143, 4
          %s153 = int_to_ptr.vmem [resolvable:$true] %s152
          %158 = dma.hbm_to_vmem [thread:$0]  %s151, 128, %s153, %s140, 64, 64, 4
        $region24: #{tpu_custom_call.1} parent=19 // pred_fallthru
          _
      $region20: #{tpu_custom_call.1} parent=5 // pred_fallthru
        _
      %p159 = scmp.le.s32.totalorder 1, %s15
      %p160 = scmp.lt.s32.totalorder %s15, 3
      %p161 = pnand %p159, %p160
      %p162 = pneg %p161
      // Predicated region
      $region25: #{tpu_custom_call.1} parent=5 // pred_check
        _
      $region26: #{tpu_custom_call.1} parent=5 // pred_check_branch
        %164 = sbr.rel (%p161) target = $region28
      $region27: #{tpu_custom_call.1} parent=5 // pred_region
        %s165 = ssub.s32 %s15, 1
        %s166 = sand.u32 %s42, 1
        %s167 = scalar_lea.sflag [#allocation3], %s166
        %s168 = sand.u32 %s42, 1
        %s169 = smul.addr %s168, 8
        %s170 = scalar_lea.vmem [#allocation2], %s169
        // Predicated region
        $region29: #{tpu_custom_call.1} parent=27 // pred_check
          %p171 = pneg %p55
        $region30: #{tpu_custom_call.1} parent=27 // pred_check_branch
          %173 = sbr.rel (%p171) target = $region32
        $region31: #{tpu_custom_call.1} parent=27 // pred_region
          %174 = dma.done %s167, 128
        $region32: #{tpu_custom_call.1} parent=27 // pred_fallthru
          _
        // Predicated region
        $region33: #{tpu_custom_call.1} parent=27 // pred_check
          %p175 = pneg %p76
        $region34: #{tpu_custom_call.1} parent=27 // pred_check_branch
          %177 = sbr.rel (%p175) target = $region36
        $region35: #{tpu_custom_call.1} parent=27 // pred_region
          %178 = dma.done [#allocation6], 256
        $region36: #{tpu_custom_call.1} parent=27 // pred_fallthru
          _
        %s179 = sand.u32 %s42, 1
        %s180 = scalar_lea.sflag [#allocation3], %s179
        %s181 = sand.u32 %s42, 1
        %s182 = smul.addr %s181, 8
        %s183 = scalar_lea.vmem [#allocation2], %s182
        %p184 = pneg %p55
        %p185 = pneg %p52
        %p186 = pneg %p76
        %p187 = pneg %p73
        %p188 = pneg %p104
        %p189 = pneg %p101
        %s190 = sand.u32 %s91, 1
        %s191 = scalar_lea.sflag [#allocation4], %s190
        %s192 = sand.u32 %s91, 1
        %s193 = scalar_lea.vmem [#allocation7], %s192
        %s194 = smul.u32 2, %s25
        %v196 = vld [vmem:[%s170] sm:$0xf]
        %v197 = vld [vmem:[%s170 + $0x4] sm:$0xf]
        %v198 = vld [vmem:[#allocation5] sm:$0xf]
        %v199 = vld [vmem:[#allocation5 + $0x4] sm:$0xf]
        %v200 = vld [vmem:[#allocation5 + $0x8] sm:$0xf]
        %v201 = vld [vmem:[#allocation5 + $0xc] sm:$0xf]
        %v204 = vunpack.c.l.b16 %v196
        %v205 = vunpack.c.l.b16 %v197
        %v206 = vpack.c.b16 %v205, %v204
        %v211 = vunpack.c.l.b16 %v198
        %v212 = vunpack.c.l.b16 %v199
        %v213 = vunpack.c.l.b16 %v200
        %v214 = vunpack.c.l.b16 %v201
        %v215 = vpack.c.b16 %v212, %v211
        %v216 = vpack.c.b16 %v214, %v213
        %vm219 = vcmask 261120
        %v221 = vsel %vm219, %v206, 0
        %223 = vmatprep.subr.bf16.mxu0 0
        %224 = vmatpush1.bf16.msra.mxu0 %v215
        %225 = vmatprep.subr.bf16.mxu0 0
        %226 = vmatpush1.bf16.msra.mxu0 %v216
        %227 = vmatprep.subr.bf16.mxu0 0
        %228 = vmatpush1.bf16.msra.mxu0 0
        %229 = vmatprep.subr.bf16.mxu0 0
        %230 = vmatpush1.bf16.msra.mxu0 0
        %231 = vmatprep.subr.bf16.mxu0 0
        %232 = vmatpush1.bf16.msra.mxu0 0
        %233 = vmatprep.subr.bf16.mxu0 0
        %234 = vmatpush1.bf16.msra.mxu0 0
        %235 = vmatprep.subr.bf16.mxu0 0
        %236 = vmatpush1.bf16.msra.mxu0 0
        %237 = vmatprep.subr.bf16.mxu0 0
        %238 = vmatpush1.bf16.msra.mxu0 0
        %239 = vmatprep.subr.bf16.mxu0 0
        %240 = vmatpush1.bf16.msra.mxu0 0
        %241 = vmatprep.subr.bf16.mxu0 0
        %242 = vmatpush1.bf16.msra.mxu0 0
        %243 = vmatprep.subr.bf16.mxu0 0
        %244 = vmatpush1.bf16.msra.mxu0 0
        %245 = vmatprep.subr.bf16.mxu0 0
        %246 = vmatpush1.bf16.msra.mxu0 0
        %247 = vmatprep.subr.bf16.mxu0 0
        %248 = vmatpush1.bf16.msra.mxu0 0
        %249 = vmatprep.subr.bf16.mxu0 0
        %250 = vmatpush1.bf16.msra.mxu0 0
        %251 = vmatprep.subr.bf16.mxu0 0
        %252 = vmatpush1.bf16.msra.mxu0 0
        %253 = vmatprep.subr.bf16.mxu0 0
        %254 = vmatpush1.bf16.msra.mxu0 0
        %255 = vmatprep.mubr.bf16.mxu0 0
        %256 = vmatmul.mubr.bf16.gmra.mrb[0].mxu0 %v221
        %v257 = vpop.f32.mrb[0].mxu0
        %v258 = vadd.f32 0.0, %v257
        %v259 = vpop.f32.mrb[0].mxu0
        %v260 = vpop.f32.mrb[0].mxu0
        %v261 = vadd.f32 0.0, %v260
        %v262 = vpop.f32.mrb[0].mxu0
        %263 = vdwg.mxu0
        %vm264 = vcmask 523264
        %v265 = vsel %vm264, %v258, -inf
        %v266 = vsel %vm264, %v261, -inf
        %v267 = vmax.f32 %v265, %v266
        %268 = vmax.xlane.f32.xlu0 %v267
        %v269 = vpop.xlane.xlu0 %268
        %v270 = vrot.slane %v269, 4
        %v271 = vmax.f32 %v269, %v270
        %v272 = vrot.slane %v271, 2
        %v273 = vmax.f32 %v271, %v272
        %v274 = vrot.slane %v273, 1
        %v275 = vmax.f32 %v273, %v274
        %s276 = vtos %v275
        %v277 = vstv %s276
        %vm278 = vcmask 0
        %279 = vst.msk [vmem:[%s193] sm:$0x1] %vm278, %v277
        %s280 = sand.u32 %s91, 1
        %s281 = scalar_lea.sflag [#allocation4], %s280
        %s282 = sand.u32 %s91, 1
        %s283 = scalar_lea.vmem [#allocation7], %s282
        // Predicated region
        $region37: #{tpu_custom_call.1} parent=27 // pred_check
          %p284 = pneg %p101
        $region38: #{tpu_custom_call.1} parent=27 // pred_check_branch
          %286 = sbr.rel (%p284) target = $region40
        $region39: #{tpu_custom_call.1} parent=27 // pred_region
          %s288 = ssub.s32 16, 16
          %289 = vsyncadd %s281, %s288
          %s290 = sadd.s32 %s25, %s24
          %s291 = smul.addr %s290, 16
          %s292 = scalar_lea.hbm %s2, %s291
          %s294 = sshll.u32 %s283, 4
          %s295 = int_to_ptr.vmem [resolvable:$true] %s294
          %297 = dma.vmem_to_hbm [thread:$0]  %s295, 16, %s292, %s281
        $region40: #{tpu_custom_call.1} parent=27 // pred_fallthru
          _
      $region28: #{tpu_custom_call.1} parent=5 // pred_fallthru
        _
      %p298 = scmp.le.s32.totalorder 2, %s15
      // Predicated region
      $region41: #{tpu_custom_call.1} parent=5 // pred_check
        %p299 = pneg %p298
      $region42: #{tpu_custom_call.1} parent=5 // pred_check_branch
        %301 = sbr.rel (%p299) target = $region44
      $region43: #{tpu_custom_call.1} parent=5 // pred_region
        %s302 = ssub.s32 %s15, 2
        // Predicated region
        $region45: #{tpu_custom_call.1} parent=43 // pred_check
          %p303 = pneg %p107
        $region46: #{tpu_custom_call.1} parent=43 // pred_check_branch
          %305 = sbr.rel (%p303) target = $region48
        $region47: #{tpu_custom_call.1} parent=43 // pred_region
          %s306 = sand.u32 %s92, 1
          %s307 = scalar_lea.sflag [#allocation4], %s306
          %s308 = sand.u32 %s92, 1
          %s309 = scalar_lea.vmem [#allocation7], %s308
          %310 = dma.done %s307, 16
        $region48: #{tpu_custom_call.1} parent=43 // pred_fallthru
          _
      $region44: #{tpu_custom_call.1} parent=5 // pred_fallthru
        _
    $region6: #{tpu_custom_call.1} parent=1 // loop_footer
      %s19 = sadd.s32 1, %s15
    $region7: #{tpu_custom_call.1} parent=1 // loop_footer_branch
      %14 = sbr.rel target = $region3
    $region8: #{tpu_custom_call.1} parent=1 // loop_exit
      _
    %311 = vsyncpa [#allocation3], 1
    %s312 = scalar_lea.sflag [#allocation3], 1
    %313 = vsyncpa %s312, 1
    %314 = vsyncpa [#allocation6], 1
    %315 = vsyncpa [#allocation4], 1
    %s316 = scalar_lea.sflag [#allocation4], 1
    %317 = vsyncpa %s316, 1

</llo_original>
